<compile_context>
chip_gen: v7x
topology: tpu7x:2x2x1
jax: 0.10.0
libtpu: 0.0.40
codegen_flags: <defaults>
</compile_context>

<pallas_src>
import functools

import jax
import jax.numpy as jnp
from jax.experimental import pallas as pl
from jax.experimental.pallas import tpu as pltpu

TAU = 1.0      # gumbel-softmax temperature
EPS = 1e-6     # LayerNorm eps (ViT default)


# ---------------------------------------------------------------------------
# Kernel 1: Gumbel-Softmax soft-mask application for 2-D weight matrices.
#   F.gumbel_softmax(stack([l, 0], -1), tau)[..., 0] == sigmoid((l + g1 - g2)/tau)
# Row-tiled (lane-dense full-width blocks) so large ViT weights pipeline through
# VMEM instead of being mapped whole.
# ---------------------------------------------------------------------------
def _mask_apply_kernel(p_ref, logit_ref, g1_ref, g2_ref, o_ref, *, tau):
    z = (logit_ref[...] + g1_ref[...] - g2_ref[...]) * (1.0 / tau)
    o_ref[...] = p_ref[...] * jax.nn.sigmoid(z)


def _apply_gumbel_mask_2d(param, logits, g1, g2, tau=TAU, block_rows=128):
    R, C = param.shape
    tr = R if R <= block_rows else block_rows          # full-dim block when small
    spec = pl.BlockSpec((tr, C), lambda i: (i, 0))      # lane-dense: full width
    return pl.pallas_call(
        functools.partial(_mask_apply_kernel, tau=tau),
        out_shape=jax.ShapeDtypeStruct((R, C), param.dtype),
        grid=(pl.cdiv(R, tr),),
        in_specs=[spec, spec, spec, spec],
        out_specs=spec,
        compiler_params=pltpu.CompilerParams(dimension_semantics=("parallel",)),
    )(param, logits, g1, g2)


def apply_gumbel_mask(param, logits, g1, g2, tau=TAU):
    if param.ndim >= 2:
        return _apply_gumbel_mask_2d(param, logits, g1, g2, tau)
    # 1-D params (biases / LN): tiny & mem-bound -> plain JAX, XLA fuses the chain.
    return param * jax.nn.sigmoid((logits + g1 - g2) / tau)


# ---------------------------------------------------------------------------
# Kernel 2: full ViT block forward (LN -> MHSA -> residual -> LN -> MLP ->
# residual) for one batch element per grid step; all weights resident in VMEM
# (bf16), activations accumulated in f32.
# ---------------------------------------------------------------------------
def _vit_block_kernel(x_ref, ln1w_ref, ln1b_ref,
                      wq_ref, wk_ref, wv_ref, qb_ref, kb_ref, vb_ref,
                      projw_ref, projb_ref, ln2w_ref, ln2b_ref,
                      fc1w_ref, fc1b_ref, fc2w_ref, fc2b_ref, o_ref,
                      *, num_heads, eps):
    x = x_ref[0]                                   # (N, D) f32
    N, D = x.shape
    H = num_heads
    dh = D // H

    def layernorm(v, w, b):                        # w, b are (1, D) f32
        mu = jnp.mean(v, axis=-1, keepdims=True)
        var = jnp.mean((v - mu) ** 2, axis=-1, keepdims=True)
        return (v - mu) * jax.lax.rsqrt(var + eps) * w + b

    # batched (leading batch dim) matmul dims: (H,N,K) x (H,K,M) -> (H,N,M)
    bmm = (((2,), (1,)), ((0,), (0,)))

    # ---- attention branch ---------------------------------------------------
    h = layernorm(x, ln1w_ref[...], ln1b_ref[...])                       # f32 (N, D)
    h_b = jnp.broadcast_to(h.astype(jnp.bfloat16)[None], (H, N, D))      # bf16 (H, N, D)

    # per-head projections, full-D contraction depth; 1/sqrt(dh) is pre-folded into wq/qb
    q = jax.lax.dot_general(h_b, wq_ref[...], bmm,
                            preferred_element_type=jnp.float32) + qb_ref[...]   # (H, N, dh)
    k = jax.lax.dot_general(h_b, wk_ref[...], bmm,
                            preferred_element_type=jnp.float32) + kb_ref[...]
    v = jax.lax.dot_general(h_b, wv_ref[...], bmm,
                            preferred_element_type=jnp.float32) + vb_ref[...]

    # scores: (H, N, dh) x (H, N, dh) -> (H, N, N), f32 softmax stats
    s = jax.lax.dot_general(q.astype(jnp.bfloat16), k.astype(jnp.bfloat16),
                            (((2,), (2,)), ((0,), (0,))),
                            preferred_element_type=jnp.float32)
    s = s - jnp.max(s, axis=-1, keepdims=True)
    e = jnp.exp(s)
    p = e * pl.reciprocal(jnp.sum(e, axis=-1, keepdims=True), approx=True)

    ctx = jax.lax.dot_general(p.astype(jnp.bfloat16), v.astype(jnp.bfloat16),
                              bmm, preferred_element_type=jnp.float32)   # (H, N, dh)

    # output projection without concat: head-batched matmul then reduce over heads
    # (== concat(heads) @ Wproj^T since projw is (H, dh, D))
    attn_h = jax.lax.dot_general(ctx.astype(jnp.bfloat16), projw_ref[...],
                                 bmm, preferred_element_type=jnp.float32)  # (H, N, D)
    attn = jnp.sum(attn_h, axis=0) + projb_ref[...]                        # (N, D)
    x = x + attn

    # ---- MLP branch ----------------------------------------------------------
    h2 = layernorm(x, ln2w_ref[...], ln2b_ref[...])
    h2 = jnp.dot(h2.astype(jnp.bfloat16), fc1w_ref[...],
                 preferred_element_type=jnp.float32) + fc1b_ref[...]
    # exact erf GELU (kept to match PyTorch nn.GELU semantics)
    h2 = 0.5 * h2 * (1.0 + jax.lax.erf(h2 * 0.7071067811865476))
    h2 = jnp.dot(h2.astype(jnp.bfloat16), fc2w_ref[...],
                 preferred_element_type=jnp.float32) + fc2b_ref[...]
    o_ref[0] = x + h2


def vit_block_pallas(x, mp, num_heads):
    """mp: dict of already-masked parameters in PyTorch (out_features, in_features) layouts."""
    B, N, D = x.shape
    H = num_heads
    dh = D // H
    Hd = mp['mlp_fc1_weight'].shape[0]
    scale = float(dh) ** -0.5

    # ---- weight prep (one-time layout plumbing, plain JAX) -------------------
    ln1w = mp['norm1_weight'].reshape(1, D)
    ln1b = mp['norm1_bias'].reshape(1, D)
    ln2w = mp['norm2_weight'].reshape(1, D)
    ln2b = mp['norm2_bias'].reshape(1, D)

    qkvw = mp['attn_qkv_weight']                     # (3D, D) pytorch layout
    qkvb = mp['attn_qkv_bias']                       # (3D,)

    def head_w(w2d, s=1.0):                          # (D_out, D_in) -> (H, D_in, dh) bf16
        return (w2d.T.reshape(D, H, dh).transpose(1, 0, 2) * s).astype(jnp.bfloat16)

    wq = head_w(qkvw[0:D], scale)                    # scale folded into Q weights
    wk = head_w(qkvw[D:2 * D])
    wv = head_w(qkvw[2 * D:3 * D])
    qb = (qkvb[0:D] * scale).reshape(H, 1, dh)       # scale folded into Q bias, f32
    kb = qkvb[D:2 * D].reshape(H, 1, dh)
    vb = qkvb[2 * D:3 * D].reshape(H, 1, dh)

    projw = mp['attn_proj_weight'].T.reshape(H, dh, D).astype(jnp.bfloat16)   # (H, dh, D)
    projb = mp['attn_proj_bias'].reshape(1, D)
    fc1w = mp['mlp_fc1_weight'].T.astype(jnp.bfloat16)                        # (D, Hd)
    fc1b = mp['mlp_fc1_bias'].reshape(1, Hd)
    fc2w = mp['mlp_fc2_weight'].T.astype(jnp.bfloat16)                        # (Hd, D)
    fc2b = mp['mlp_fc2_bias'].reshape(1, D)

    weights = (ln1w, ln1b, wq, wk, wv, qb, kb, vb, projw, projb,
               ln2w, ln2b, fc1w, fc1b, fc2w, fc2b)

    # ---- explicit scoped-VMEM budget: weights (double-buffered) + x/out blocks
    # + rough f32 activation intermediates, floored at the 32 MiB default.
    weight_bytes = sum(int(a.size) * a.dtype.itemsize for a in weights)
    block_io_bytes = 2 * (N * D * 4)
    interm_bytes = 4 * (3 * N * D + 4 * H * N * dh + H * N * N + H * N * D + 2 * N * Hd)
    vmem_limit = int(min(max(2 * (weight_bytes + block_io_bytes) + 2 * interm_bytes
                             + (4 << 20), 32 << 20), 96 << 20))

    def full(shape):
        return pl.BlockSpec(shape, lambda b, _s=shape: (0,) * len(_s))

    return pl.pallas_call(
        functools.partial(_vit_block_kernel, num_heads=num_heads, eps=EPS),
        out_shape=jax.ShapeDtypeStruct((B, N, D), x.dtype),
        grid=(B,),
        in_specs=[pl.BlockSpec((1, N, D), lambda b: (b, 0, 0))]
                 + [full(a.shape) for a in weights],
        out_specs=pl.BlockSpec((1, N, D), lambda b: (b, 0, 0)),
        compiler_params=pltpu.CompilerParams(
            dimension_semantics=("parallel",),
            vmem_limit_bytes=vmem_limit),
    )(x, *weights)


# ---------------------------------------------------------------------------
# Pure-JAX f32 reference of MaskedBlock.forward (same gumbel noise) for a sanity check.
# ---------------------------------------------------------------------------
def ref_forward(x, params, mask_logits, gumbel_noise, num_heads, tau=TAU, eps=EPS):
    mp = {}
    for name, p in params.items():
        g1, g2 = gumbel_noise[name]
        mp[name] = p * jax.nn.sigmoid((mask_logits[name] + g1 - g2) / tau)

    def layernorm(v, w, b):
        mu = jnp.mean(v, axis=-1, keepdims=True)
        var = jnp.mean((v - mu) ** 2, axis=-1, keepdims=True)
        return (v - mu) / jnp.sqrt(var + eps) * w + b

    B, N, D = x.shape
    dh = D // num_heads
    h = layernorm(x, mp['norm1_weight'], mp['norm1_bias'])
    qkv = h @ mp['attn_qkv_weight'].T + mp['attn_qkv_bias']          # (B,N,3D)
    qkv = qkv.reshape(B, N, 3, num_heads, dh).transpose(2, 0, 3, 1, 4)
    q, k, v = qkv[0], qkv[1], qkv[2]                                 # (B,H,N,dh)
    att = (q * dh ** -0.5) @ jnp.swapaxes(k, -1, -2)
    att = jax.nn.softmax(att, axis=-1)
    out = (att @ v).transpose(0, 2, 1, 3).reshape(B, N, D)
    out = out @ mp['attn_proj_weight'].T + mp['attn_proj_bias']
    x = x + out
    h2 = layernorm(x, mp['norm2_weight'], mp['norm2_bias'])
    h2 = h2 @ mp['mlp_fc1_weight'].T + mp['mlp_fc1_bias']
    h2 = 0.5 * h2 * (1.0 + jax.lax.erf(h2 * 0.7071067811865476))
    h2 = h2 @ mp['mlp_fc2_weight'].T + mp['mlp_fc2_bias']
    return x + h2


if __name__ == "__main__":
    B, N, D, H, MLP = 2, 8, 32, 4, 128    # batch, seq, dim, heads, mlp hidden

    key = jax.random.PRNGKey(0)
    k_x, k_p, k_m, k_g = jax.random.split(key, 4)

    x = jax.random.normal(k_x, (B, N, D), dtype=jnp.float32)

    # deterministic synthetic block parameters (PyTorch layouts)
    pkeys = jax.random.split(k_p, 4)
    params = {
        'norm1_weight':      jnp.ones((D,), jnp.float32),
        'norm1_bias':        jnp.zeros((D,), jnp.float32),
        'attn_qkv_weight':   0.02 * jax.random.normal(pkeys[0], (3 * D, D), jnp.float32),
        'attn_qkv_bias':     jnp.zeros((3 * D,), jnp.float32),
        'attn_proj_weight':  0.02 * jax.random.normal(pkeys[1], (D, D), jnp.float32),
        'attn_proj_bias':    jnp.zeros((D,), jnp.float32),
        'norm2_weight':      jnp.ones((D,), jnp.float32),
        'norm2_bias':        jnp.zeros((D,), jnp.float32),
        'mlp_fc1_weight':    0.02 * jax.random.normal(pkeys[2], (MLP, D), jnp.float32),
        'mlp_fc1_bias':      jnp.zeros((MLP,), jnp.float32),
        'mlp_fc2_weight':    0.02 * jax.random.normal(pkeys[3], (D, MLP), jnp.float32),
        'mlp_fc2_bias':      jnp.zeros((D,), jnp.float32),
    }

    # mask logits: randn_like(param) * 0.01, one per trainable parameter
    mkeys = jax.random.split(k_m, len(params))
    mask_logits = {n: 0.01 * jax.random.normal(kk, p.shape, jnp.float32)
                   for kk, (n, p) in zip(mkeys, params.items())}

    # gumbel noise for the soft gumbel-softmax mask (sampled once, shared by the
    # Pallas path and the reference so they are comparable)
    gkeys = jax.random.split(k_g, len(params))
    gumbel_noise = {}
    for kk, n in zip(gkeys, params):
        k1, k2 = jax.random.split(kk)
        gumbel_noise[n] = (jax.random.gumbel(k1, params[n].shape, jnp.float32),
                           jax.random.gumbel(k2, params[n].shape, jnp.float32))

    # Pallas path: mask every trainable parameter, then run the ViT block.
    masked = {n: apply_gumbel_mask(params[n], mask_logits[n], *gumbel_noise[n])
              for n in params}
    out = vit_block_pallas(x, masked, num_heads=H)
    out = jax.block_until_ready(out)

    ref = ref_forward(x, params, mask_logits, gumbel_noise, H)
    assert out.shape == (B, N, D)
    err = float(jnp.max(jnp.abs(out - ref)))
    assert jnp.allclose(out, ref, atol=5e-2, rtol=5e-2), f"max abs err {err}"

    print("KERNEL_OK")
</pallas_src>

<mosaic_0001>
module attributes {stable_mosaic.version = 11 : i64} {
  func.func @_mask_apply_kernel(%arg0: i32, %arg1: memref<96x32xf32, #tpu.memory_space<vmem>>, %arg2: memref<96x32xf32, #tpu.memory_space<vmem>>, %arg3: memref<96x32xf32, #tpu.memory_space<vmem>>, %arg4: memref<96x32xf32, #tpu.memory_space<vmem>>, %arg5: memref<96x32xf32, #tpu.memory_space<vmem>>) attributes {dimension_semantics = [#tpu.dimension_semantics<parallel>], iteration_bounds = array<i64: 1>, scalar_prefetch = 0 : i64, scratch_operands = 0 : i64, tpu.core_type = #tpu.core_type<tc>, window_params = [{transform_indices = @transform_0, window_bounds = array<i64: 96, 32>}, {transform_indices = @transform_1, window_bounds = array<i64: 96, 32>}, {transform_indices = @transform_2, window_bounds = array<i64: 96, 32>}, {transform_indices = @transform_3, window_bounds = array<i64: 96, 32>}, {transform_indices = @transform_4, window_bounds = array<i64: 96, 32>}]} {
    %c0 = arith.constant 0 : index
    %c0_0 = arith.constant 0 : index
    %0 = vector.load %arg2[%c0, %c0_0] : memref<96x32xf32, #tpu.memory_space<vmem>>, vector<96x32xf32>
    %c0_1 = arith.constant 0 : index
    %c0_2 = arith.constant 0 : index
    %1 = vector.load %arg3[%c0_1, %c0_2] : memref<96x32xf32, #tpu.memory_space<vmem>>, vector<96x32xf32>
    %2 = arith.addf %0, %1 : vector<96x32xf32>
    %c0_3 = arith.constant 0 : index
    %c0_4 = arith.constant 0 : index
    %3 = vector.load %arg4[%c0_3, %c0_4] : memref<96x32xf32, #tpu.memory_space<vmem>>, vector<96x32xf32>
    %4 = arith.subf %2, %3 : vector<96x32xf32>
    %cst = arith.constant 1.000000e+00 : f32
    %5 = vector.broadcast %cst : f32 to vector<96x32xf32>
    %6 = arith.mulf %4, %5 : vector<96x32xf32>
    %c0_5 = arith.constant 0 : index
    %c0_6 = arith.constant 0 : index
    %7 = vector.load %arg1[%c0_5, %c0_6] : memref<96x32xf32, #tpu.memory_space<vmem>>, vector<96x32xf32>
    %8 = arith.negf %6 : vector<96x32xf32>
    %9 = math.exp %8 : vector<96x32xf32>
    %cst_7 = arith.constant 1.000000e+00 : f32
    %10 = vector.broadcast %cst_7 : f32 to vector<96x32xf32>
    %11 = arith.addf %10, %9 : vector<96x32xf32>
    %12 = arith.divf %10, %11 : vector<96x32xf32>
    %13 = arith.mulf %7, %12 : vector<96x32xf32>
    %c0_8 = arith.constant 0 : index
    %c0_9 = arith.constant 0 : index
    %14 = vector.load %arg5[%c0_8, %c0_9] : memref<96x32xf32, #tpu.memory_space<vmem>>, vector<96x32xf32>
    tpu.vector_store %arg5[%c0_8, %c0_9], %13 {strides = array<i32>} : memref<96x32xf32, #tpu.memory_space<vmem>>, vector<96x32xf32>,
    return
  }
  func.func @transform_0(%arg0: i32) -> (i32, i32) {
    %c0_i32 = arith.constant 0 : i32
    %c0_i32_0 = arith.constant 0 : i32
    return %arg0, %c0_i32 : i32, i32
  }
  func.func @transform_1(%arg0: i32) -> (i32, i32) {
    %c0_i32 = arith.constant 0 : i32
    %c0_i32_0 = arith.constant 0 : i32
    return %arg0, %c0_i32 : i32, i32
  }
  func.func @transform_2(%arg0: i32) -> (i32, i32) {
    %c0_i32 = arith.constant 0 : i32
    %c0_i32_0 = arith.constant 0 : i32
    return %arg0, %c0_i32 : i32, i32
  }
  func.func @transform_3(%arg0: i32) -> (i32, i32) {
    %c0_i32 = arith.constant 0 : i32
    %c0_i32_0 = arith.constant 0 : i32
    return %arg0, %c0_i32 : i32, i32
  }
  func.func @transform_4(%arg0: i32) -> (i32, i32) {
    %c0_i32 = arith.constant 0 : i32
    %c0_i32_0 = arith.constant 0 : i32
    return %arg0, %c0_i32 : i32, i32
  }
}

</mosaic_0001>

<llo_original>
// kernel: tpu_custom_call.1
$region0: #{tpu_custom_call.1}
  #allocation0 [shape = 'u32[]', space=smem, size = 0x4, offset = 0x4, fixed_abs, tag = 'smem constant byte address 0x4 - core index']
  #allocation1 [shape = 'u32[144,128]{1,0:T(1,128)}', space=vmem, size = 0x12000, scoped, tag = 'internal scratch']
  %s0 = inlined_call_operand.vmem [shape: f32[96,32], index: 0, kind: input, shape index: {}]
  %s1 = inlined_call_operand.vmem [shape: f32[96,32], index: 1, kind: input, shape index: {}]
  %s2 = inlined_call_operand.vmem [shape: f32[96,32], index: 2, kind: input, shape index: {}]
  %s3 = inlined_call_operand.vmem [shape: f32[96,32], index: 3, kind: input, shape index: {}]
  %s4 = inlined_call_operand.vmem [shape: f32[96,32], index: 4, kind: output, shape index: {}]
  %s5 = sld [smem:[#allocation0]]
  $region26: #{tpu_custom_call.1} parent=0
    _
  %s7 = ssub.s32 1, %s5
  %s8 = scalar_select 0, %s7, %s5
  // Predicated region
  $region2: #{tpu_custom_call.1} parent=0 // pred_check
    _
  $region3: #{tpu_custom_call.1} parent=0 // pred_check_branch
    %10 = sbr.rel (0) target = $region5
  $region4: #{tpu_custom_call.1} parent=0 // pred_region
    _
  $region5: #{tpu_custom_call.1} parent=0 // pred_fallthru
    _
  // Predicated region
  $region6: #{tpu_custom_call.1} parent=0 // pred_check
    _
  $region7: #{tpu_custom_call.1} parent=0 // pred_check_branch
    %12 = sbr.rel (0) target = $region9
  $region8: #{tpu_custom_call.1} parent=0 // pred_region
    _
  $region9: #{tpu_custom_call.1} parent=0 // pred_fallthru
    _
  // Predicated region
  $region10: #{tpu_custom_call.1} parent=0 // pred_check
    _
  $region11: #{tpu_custom_call.1} parent=0 // pred_check_branch
    %14 = sbr.rel (0) target = $region13
  $region12: #{tpu_custom_call.1} parent=0 // pred_region
    _
  $region13: #{tpu_custom_call.1} parent=0 // pred_fallthru
    _
  // Predicated region
  $region14: #{tpu_custom_call.1} parent=0 // pred_check
    _
  $region15: #{tpu_custom_call.1} parent=0 // pred_check_branch
    %16 = sbr.rel (0) target = $region17
  $region16: #{tpu_custom_call.1} parent=0 // pred_region
    _
  $region17: #{tpu_custom_call.1} parent=0 // pred_fallthru
    _
  %v17 = vld [vmem:[%s1] sm:$0xff]
  %v18 = vld [vmem:[%s1 + $0x8] sm:$0xff]
  %v19 = vld [vmem:[%s1 + $0x10] sm:$0xff]
  %v20 = vld [vmem:[%s1 + $0x18] sm:$0xff]
  %v21 = vld [vmem:[%s1 + $0x20] sm:$0xff]
  %v22 = vld [vmem:[%s1 + $0x28] sm:$0xff]
  %v23 = vld [vmem:[%s1 + $0x30] sm:$0xff]
  %v24 = vld [vmem:[%s1 + $0x38] sm:$0xff]
  %v25 = vld [vmem:[%s1 + $0x40] sm:$0xff]
  %v26 = vld [vmem:[%s1 + $0x48] sm:$0xff]
  %v27 = vld [vmem:[%s1 + $0x50] sm:$0xff]
  %v28 = vld [vmem:[%s1 + $0x58] sm:$0xff]
  %v29 = vld [vmem:[%s2] sm:$0xff]
  %v30 = vld [vmem:[%s2 + $0x8] sm:$0xff]
  %v31 = vld [vmem:[%s2 + $0x10] sm:$0xff]
  %v32 = vld [vmem:[%s2 + $0x18] sm:$0xff]
  %v33 = vld [vmem:[%s2 + $0x20] sm:$0xff]
  %v34 = vld [vmem:[%s2 + $0x28] sm:$0xff]
  %v35 = vld [vmem:[%s2 + $0x30] sm:$0xff]
  %v36 = vld [vmem:[%s2 + $0x38] sm:$0xff]
  %v37 = vld [vmem:[%s2 + $0x40] sm:$0xff]
  %v38 = vld [vmem:[%s2 + $0x48] sm:$0xff]
  %v39 = vld [vmem:[%s2 + $0x50] sm:$0xff]
  %v40 = vld [vmem:[%s2 + $0x58] sm:$0xff]
  %v41 = vadd.f32 %v17, %v29
  %v42 = vadd.f32 %v18, %v30
  %v43 = vadd.f32 %v19, %v31
  %v44 = vadd.f32 %v20, %v32
  %v45 = vadd.f32 %v21, %v33
  %v46 = vadd.f32 %v22, %v34
  %v47 = vadd.f32 %v23, %v35
  %v48 = vadd.f32 %v24, %v36
  %v49 = vadd.f32 %v25, %v37
  %v50 = vadd.f32 %v26, %v38
  %v51 = vadd.f32 %v27, %v39
  %v52 = vadd.f32 %v28, %v40
  %v53 = vld [vmem:[%s3] sm:$0xff]
  %v54 = vld [vmem:[%s3 + $0x8] sm:$0xff]
  %v55 = vld [vmem:[%s3 + $0x10] sm:$0xff]
  %v56 = vld [vmem:[%s3 + $0x18] sm:$0xff]
  %v57 = vld [vmem:[%s3 + $0x20] sm:$0xff]
  %v58 = vld [vmem:[%s3 + $0x28] sm:$0xff]
  %v59 = vld [vmem:[%s3 + $0x30] sm:$0xff]
  %v60 = vld [vmem:[%s3 + $0x38] sm:$0xff]
  %v61 = vld [vmem:[%s3 + $0x40] sm:$0xff]
  %v62 = vld [vmem:[%s3 + $0x48] sm:$0xff]
  %v63 = vld [vmem:[%s3 + $0x50] sm:$0xff]
  %v64 = vld [vmem:[%s3 + $0x58] sm:$0xff]
  %v65 = vsub.f32 %v41, %v53
  %v66 = vsub.f32 %v42, %v54
  %v67 = vsub.f32 %v43, %v55
  %v68 = vsub.f32 %v44, %v56
  %v69 = vsub.f32 %v45, %v57
  %v70 = vsub.f32 %v46, %v58
  %v71 = vsub.f32 %v47, %v59
  %v72 = vsub.f32 %v48, %v60
  %v73 = vsub.f32 %v49, %v61
  %v74 = vsub.f32 %v50, %v62
  %v75 = vsub.f32 %v51, %v63
  %v76 = vsub.f32 %v52, %v64
  %v77 = vld [vmem:[%s0] sm:$0xff]
  %v78 = vld [vmem:[%s0 + $0x8] sm:$0xff]
  %v79 = vld [vmem:[%s0 + $0x10] sm:$0xff]
  %v80 = vld [vmem:[%s0 + $0x18] sm:$0xff]
  %v81 = vld [vmem:[%s0 + $0x20] sm:$0xff]
  %v82 = vld [vmem:[%s0 + $0x28] sm:$0xff]
  %v83 = vld [vmem:[%s0 + $0x30] sm:$0xff]
  %v84 = vld [vmem:[%s0 + $0x38] sm:$0xff]
  %v85 = vld [vmem:[%s0 + $0x40] sm:$0xff]
  %v86 = vld [vmem:[%s0 + $0x48] sm:$0xff]
  %v87 = vld [vmem:[%s0 + $0x50] sm:$0xff]
  %v88 = vld [vmem:[%s0 + $0x58] sm:$0xff]
  %v89 = vxor.u32 %v65, 2147483648
  %v90 = vxor.u32 %v66, 2147483648
  %v91 = vxor.u32 %v67, 2147483648
  %v92 = vxor.u32 %v68, 2147483648
  %v93 = vxor.u32 %v69, 2147483648
  %v94 = vxor.u32 %v70, 2147483648
  %v95 = vxor.u32 %v71, 2147483648
  %v96 = vxor.u32 %v72, 2147483648
  %v97 = vxor.u32 %v73, 2147483648
  %v98 = vxor.u32 %v74, 2147483648
  %v99 = vxor.u32 %v75, 2147483648
  %v100 = vxor.u32 %v76, 2147483648
  %v101 = vmul.f32 %v89, 1.442695
  %v102 = vpow.pop %v101
  %v103 = vmul.f32 %v90, 1.442695
  %v104 = vpow.pop %v103
  %v105 = vmul.f32 %v91, 1.442695
  %v106 = vpow.pop %v105
  %v107 = vmul.f32 %v92, 1.442695
  %v108 = vpow.pop %v107
  %v109 = vmul.f32 %v93, 1.442695
  %v110 = vpow.pop %v109
  %v111 = vmul.f32 %v94, 1.442695
  %v112 = vpow.pop %v111
  %v113 = vmul.f32 %v95, 1.442695
  %v114 = vpow.pop %v113
  %v115 = vmul.f32 %v96, 1.442695
  %v116 = vpow.pop %v115
  %v117 = vmul.f32 %v97, 1.442695
  %v118 = vpow.pop %v117
  %v119 = vmul.f32 %v98, 1.442695
  %v120 = vpow.pop %v119
  %v121 = vmul.f32 %v99, 1.442695
  %v122 = vpow.pop %v121
  %v123 = vmul.f32 %v100, 1.442695
  %v124 = vpow.pop %v123
  %v125 = vadd.f32 %v102, 1.0
  %v126 = vadd.f32 %v104, 1.0
  %v127 = vadd.f32 %v106, 1.0
  %v128 = vadd.f32 %v108, 1.0
  %v129 = vadd.f32 %v110, 1.0
  %v130 = vadd.f32 %v112, 1.0
  %v131 = vadd.f32 %v114, 1.0
  %v132 = vadd.f32 %v116, 1.0
  %v133 = vadd.f32 %v118, 1.0
  %v134 = vadd.f32 %v120, 1.0
  %v135 = vadd.f32 %v122, 1.0
  %v136 = vadd.f32 %v124, 1.0
  %v137 = vrcp.pop %v125
  %v138 = vmul.f32 1.0, %v137
  %v139 = vrcp.pop %v126
  %v140 = vmul.f32 1.0, %v139
  %v141 = vrcp.pop %v127
  %v142 = vmul.f32 1.0, %v141
  %v143 = vrcp.pop %v128
  %v144 = vmul.f32 1.0, %v143
  %v145 = vrcp.pop %v129
  %v146 = vmul.f32 1.0, %v145
  %v147 = vrcp.pop %v130
  %v148 = vmul.f32 1.0, %v147
  %v149 = vrcp.pop %v131
  %v150 = vmul.f32 1.0, %v149
  %v151 = vrcp.pop %v132
  %v152 = vmul.f32 1.0, %v151
  %v153 = vrcp.pop %v133
  %v154 = vmul.f32 1.0, %v153
  %v155 = vrcp.pop %v134
  %v156 = vmul.f32 1.0, %v155
  %v157 = vrcp.pop %v135
  %v158 = vmul.f32 1.0, %v157
  %v159 = vrcp.pop %v136
  %v160 = vmul.f32 1.0, %v159
  %v161 = vmul.f32 %v77, %v138
  %v162 = vmul.f32 %v78, %v140
  %v163 = vmul.f32 %v79, %v142
  %v164 = vmul.f32 %v80, %v144
  %v165 = vmul.f32 %v81, %v146
  %v166 = vmul.f32 %v82, %v148
  %v167 = vmul.f32 %v83, %v150
  %v168 = vmul.f32 %v84, %v152
  %v169 = vmul.f32 %v85, %v154
  %v170 = vmul.f32 %v86, %v156
  %v171 = vmul.f32 %v87, %v158
  %v172 = vmul.f32 %v88, %v160
  %vm173 = vcmask 261120
  %174 = vst.msk [vmem:[%s4] sm:$0xff] %vm173, %v161
  %175 = vst.msk [vmem:[%s4 + $0x8] sm:$0xff] %vm173, %v162
  %176 = vst.msk [vmem:[%s4 + $0x10] sm:$0xff] %vm173, %v163
  %177 = vst.msk [vmem:[%s4 + $0x18] sm:$0xff] %vm173, %v164
  %178 = vst.msk [vmem:[%s4 + $0x20] sm:$0xff] %vm173, %v165
  %179 = vst.msk [vmem:[%s4 + $0x28] sm:$0xff] %vm173, %v166
  %180 = vst.msk [vmem:[%s4 + $0x30] sm:$0xff] %vm173, %v167
  %181 = vst.msk [vmem:[%s4 + $0x38] sm:$0xff] %vm173, %v168
  %182 = vst.msk [vmem:[%s4 + $0x40] sm:$0xff] %vm173, %v169
  %183 = vst.msk [vmem:[%s4 + $0x48] sm:$0xff] %vm173, %v170
  %184 = vst.msk [vmem:[%s4 + $0x50] sm:$0xff] %vm173, %v171
  %185 = vst.msk [vmem:[%s4 + $0x58] sm:$0xff] %vm173, %v172
  // Predicated region
  $region18: #{tpu_custom_call.1} parent=0 // pred_check
    _
  $region19: #{tpu_custom_call.1} parent=0 // pred_check_branch
    %187 = sbr.rel (0) target = $region21
  $region20: #{tpu_custom_call.1} parent=0 // pred_region
    _
  $region21: #{tpu_custom_call.1} parent=0 // pred_fallthru
    _
  // Predicated region
  $region22: #{tpu_custom_call.1} parent=0 // pred_check
    _
  $region23: #{tpu_custom_call.1} parent=0 // pred_check_branch
    %189 = sbr.rel (0) target = $region25
  $region24: #{tpu_custom_call.1} parent=0 // pred_region
    _
  $region25: #{tpu_custom_call.1} parent=0 // pred_fallthru
    _

</llo_original>
